<compile_context>
chip_gen: v7x
topology: tpu7x:2x2x1
jax: 0.10.0
libtpu: 0.0.40
codegen_flags: <defaults>
</compile_context>

<pallas_src>
import jax
import jax.numpy as jnp
from jax.experimental import pallas as pl
from jax.experimental.pallas import tpu as pltpu


def autopad(k, p=None, d=1):
    """Same autopad as ultralytics: pad to 'same' for stride-1."""
    if d > 1:
        k = d * (k - 1) + 1
    if p is None:
        p = k // 2
    return p


def _rup(v, m):
    return (v + m - 1) // m * m


# ----------------------------- Pallas kernel -------------------------------

def _gemm_bias_silu_kernel(x_ref, w_ref, b_ref, o_ref, acc_ref):
    # x_ref:  (tm, tk) bf16  im2col patches tile
    # w_ref:  (tk, tn) bf16  reshaped conv-weight tile
    # b_ref:  (1,  tn) f32   bias tile
    # o_ref:  (tm, tn)       output tile
    # acc_ref:(tm, tn) f32   accumulator, resident across the K grid axis
    kidx = pl.program_id(2)
    prod = jnp.dot(x_ref[...], w_ref[...], preferred_element_type=jnp.float32)

    @pl.when(kidx == 0)
    def _():
        acc_ref[...] = prod            # first K step: assign (no zero-fill + add)

    @pl.when(kidx > 0)
    def _():
        acc_ref[...] += prod

    @pl.when(kidx == pl.num_programs(2) - 1)
    def _():
        acc = acc_ref[...] + b_ref[...]                              # bias in f32
        o_ref[...] = (acc * jax.nn.sigmoid(acc)).astype(o_ref.dtype)  # SiLU


def _gemm_bias_silu(patches_bf16, w_p, b_p, *, c2, tn, tk, out_dtype=jnp.float32):
    """patches: (M, K) bf16; w_p: (Kp, Np) bf16 pre-padded; b_p: (1, Np) f32.

    Returns SiLU(patches @ w + b) with shape (M, c2), dtype out_dtype.
    """
    M, K = patches_bf16.shape
    Kp, Np = w_p.shape

    # ---- M tiling: big tm amortizes weight re-fetch (w tile re-DMA'd Mp/tm times)
    m8 = _rup(M, 8)
    tm = min(1024, m8)                 # m8 is a multiple of 8, so tm is too
    Mp = _rup(m8, tm)
    # v7x megacore: guarantee >= 2 blocks across the parallel (i, j) axes so both
    # TensorCores get work on small layers (harmless on 1-TC v5e/v6e).
    while (Mp // tm) * (Np // tn) < 2 and tm > 8:
        tm = max(8, (tm // 16) * 8)    # halve, keep a multiple of 8
        Mp = _rup(m8, tm)

    x_p = jnp.pad(patches_bf16, ((0, Mp - M), (0, Kp - K)))

    grid = (Mp // tm, Np // tn, Kp // tk)   # reduction (K) axis last

    out_itemsize = jnp.dtype(out_dtype).itemsize
    cost = pl.CostEstimate(
        flops=2 * Mp * Kp * Np,
        transcendentals=2 * Mp * Np,                     # sigmoid ~ exp + recip
        bytes_accessed=(Mp * Kp * 2) * (Np // tn)        # A re-read per N block
                       + (Kp * Np * 2) * (Mp // tm)      # B re-read per M block
                       + Np * 4                          # bias
                       + Mp * Np * out_itemsize,         # output store
    )

    # Per-step VMEM: double-buffered bf16 inputs + output tiles + f32 accumulator.
    vmem_need = ((tm * tk + tk * tn) * 2 * 2
                 + tn * 4 * 2
                 + tm * tn * out_itemsize * 2
                 + tm * tn * 4)
    vmem_limit = int(min(max(2 * vmem_need, 16 * 1024 * 1024), 32 * 1024 * 1024))

    out = pl.pallas_call(
        _gemm_bias_silu_kernel,
        out_shape=jax.ShapeDtypeStruct((Mp, Np), out_dtype),
        grid_spec=pltpu.PrefetchScalarGridSpec(
            num_scalar_prefetch=0,
            grid=grid,
            in_specs=[
                pl.BlockSpec((tm, tk), lambda i, j, k: (i, k)),
                pl.BlockSpec((tk, tn), lambda i, j, k: (k, j)),
                pl.BlockSpec((1, tn), lambda i, j, k: (0, j)),
            ],
            out_specs=pl.BlockSpec((tm, tn), lambda i, j, k: (i, j)),
            scratch_shapes=[pltpu.VMEM((tm, tn), jnp.float32)],
        ),
        compiler_params=pltpu.CompilerParams(
            dimension_semantics=("parallel", "parallel", "arbitrary"),
            vmem_limit_bytes=vmem_limit),
        cost_estimate=cost,
    )(x_p, w_p, b_p)
    return out[:M, :c2]


# ------------------------------ TtConv wrapper ------------------------------

class TtConvPallas:
    """Conv2d(c1, c2, k, s, autopad, groups=1, dilation=d, bias=True) + SiLU."""

    def __init__(self, key, c1, c2, k=1, s=1, p=None, g=1, d=1, act=True):
        assert act is True, "only SiLU supported (same as reference)"
        if g != 1:
            # TODO(synk): grouped conv not implemented (YOLOv3 Conv uses g=1)
            raise NotImplementedError("groups != 1 not supported")
        self.c1, self.c2, self.k, self.s, self.d = c1, c2, k, s, d
        self.p = autopad(k, p, d)

        kw_key, kb_key = jax.random.split(key)
        fan_in = c1 * k * k
        self.weight = jax.random.normal(kw_key, (c2, c1, k, k), jnp.float32) / jnp.sqrt(fan_in)
        self.bias = jax.random.normal(kb_key, (c2,), jnp.float32) * 0.01

        # ---- GEMM-side layer constants, built ONCE (not per call) ----
        K = k * k * c1
        n128 = _rup(c2, 128)
        self.tn = 256 if n128 >= 256 else 128       # lane-dense; 256 matches v6e/v7x MXU
        self.Np = _rup(n128, self.tn)               # pad N up instead of shrinking tn
        k128 = _rup(K, 128)
        self.tk = min(512, k128)                    # keep K tiles fat
        self.Kp = _rup(k128, self.tk)               # pad K up instead of shrinking tk
        # (c2, c1, kh, kw) -> (kh, kw, c1, c2) -> (K, c2); matches im2col K order
        w_mat = jnp.transpose(self.weight, (2, 3, 1, 0)).reshape(K, c2)
        self.w_p = jnp.pad(w_mat.astype(jnp.bfloat16),
                           ((0, self.Kp - K), (0, self.Np - c2)))
        self.b_p = jnp.pad(self.bias.astype(jnp.float32),
                           ((0, self.Np - c2),)).reshape(1, self.Np)
        # TODO(synk): v7x-only: store w_p in fp8 with per-output-channel scales
        # folded into the bias epilogue to halve weight DMA again.

    def _im2col_nhwc(self, x_nhwc):
        """x_nhwc: (N, H, W, C) bf16 -> (M, k*k*C) patches with (kh, kw, C) K-order."""
        N, H, W, C = x_nhwc.shape
        k, s, p, d = self.k, self.s, self.p, self.d
        H_out = (H + 2 * p - d * (k - 1) - 1) // s + 1
        W_out = (W + 2 * p - d * (k - 1) - 1) // s + 1

        if k == 1:
            # 1x1 conv fast path: no im2col, no k*k activation inflation.
            x_pad = x_nhwc if p == 0 else jnp.pad(
                x_nhwc, ((0, 0), (p, p), (p, p), (0, 0)))
            sl = x_pad[:, 0:s * (H_out - 1) + 1:s, 0:s * (W_out - 1) + 1:s, :]
            return sl.reshape(N * H_out * W_out, C), (N, H_out, W_out)

        # TODO(synk): fold (kh, kw) into the kernel's K grid axis with manual
        # offset/halo DMAs so this k*k-inflated patches slab never hits HBM.
        x_pad = jnp.pad(x_nhwc, ((0, 0), (p, p), (p, p), (0, 0)))
        cols = []
        for i in range(k):
            for j in range(k):
                h0, w0 = i * d, j * d
                cols.append(x_pad[:, h0:h0 + s * (H_out - 1) + 1:s,
                                  w0:w0 + s * (W_out - 1) + 1:s, :])
        # (N, H_out, W_out, k*k, C) -> (M, k*k*C); C stays minor (lane-dense)
        patches = jnp.stack(cols, axis=3)
        return patches.reshape(N * H_out * W_out, self.k * self.k * C), (N, H_out, W_out)

    def forward_nhwc(self, x_nhwc, out_dtype=jnp.float32):
        """NHWC in -> NHWC out. Use out_dtype=jnp.bfloat16 when chaining layers."""
        x_bf16 = x_nhwc.astype(jnp.bfloat16)     # cast BEFORE padding / im2col
        patches, (N, H_out, W_out) = self._im2col_nhwc(x_bf16)
        out = _gemm_bias_silu(patches, self.w_p, self.b_p, c2=self.c2,
                              tn=self.tn, tk=self.tk, out_dtype=out_dtype)
        return out.reshape(N, H_out, W_out, self.c2)

    def __call__(self, x, out_dtype=jnp.float32):
        # External API is NCHW (matches PyTorch). For chained layers, prefer
        # forward_nhwc end-to-end so these two transposes (full HBM round-trips)
        # and the f32 intermediate stores disappear.
        x_nhwc = jnp.transpose(x, (0, 2, 3, 1))
        out = self.forward_nhwc(x_nhwc, out_dtype=out_dtype)
        return jnp.transpose(out, (0, 3, 1, 2))


# ---------------------------------- main ------------------------------------

if __name__ == "__main__":
    key = jax.random.PRNGKey(0)
    k_a, k_b, k_c, k_x = jax.random.split(key, 4)

    # Small shapes consistent with a YOLOv3 Conv block.
    N, C1, H, W = 2, 4, 16, 16
    x = jax.random.normal(k_x, (N, C1, H, W), jnp.float32)

    def ref_conv_silu(conv, xx):
        # bf16-cast reference (kernel computes the GEMM in bf16 w/ f32 accum).
        xb = xx.astype(jnp.bfloat16).astype(jnp.float32)
        wb = conv.weight.astype(jnp.bfloat16).astype(jnp.float32)
        r = jax.lax.conv_general_dilated(
            xb, wb, window_strides=(conv.s, conv.s),
            padding=[(conv.p, conv.p), (conv.p, conv.p)],
            rhs_dilation=(conv.d, conv.d),
            dimension_numbers=("NCHW", "OIHW", "NCHW"))
        r = r + conv.bias[None, :, None, None]
        return r * jax.nn.sigmoid(r)

    # 3x3, stride-1 conv + SiLU
    conv_a = TtConvPallas(k_a, c1=C1, c2=8, k=3, s=1)
    y_a = conv_a(x)
    jax.block_until_ready(y_a)
    r_a = ref_conv_silu(conv_a, x)
    assert y_a.shape == r_a.shape, (y_a.shape, r_a.shape)
    assert jnp.allclose(y_a, r_a, atol=2e-3, rtol=2e-3), \
        float(jnp.max(jnp.abs(y_a - r_a)))

    # 3x3, stride-2 downsample conv + SiLU (used throughout YOLOv3)
    conv_c = TtConvPallas(k_c, c1=C1, c2=8, k=3, s=2)
    y_c = conv_c(x)
    jax.block_until_ready(y_c)
    r_c = ref_conv_silu(conv_c, x)
    assert y_c.shape == r_c.shape, (y_c.shape, r_c.shape)
    assert jnp.allclose(y_c, r_c, atol=2e-3, rtol=2e-3), \
        float(jnp.max(jnp.abs(y_c - r_c)))

    # 1x1 conv (im2col-free fast path) chained in NHWC with a bf16 intermediate,
    # exercising the bf16-output / NHWC-end-to-end path.
    conv_b = TtConvPallas(k_b, c1=8, c2=16, k=1, s=1)
    x_nhwc = jnp.transpose(x, (0, 2, 3, 1))
    h_nhwc = conv_a.forward_nhwc(x_nhwc, out_dtype=jnp.bfloat16)   # bf16, NHWC
    y_ab = conv_b.forward_nhwc(h_nhwc)                              # f32 out
    jax.block_until_ready(y_ab)
    r_ab = ref_conv_silu(conv_b, r_a)   # reference re-rounds its input to bf16
    y_ab_nchw = jnp.transpose(y_ab, (0, 3, 1, 2))
    assert y_ab_nchw.shape == r_ab.shape, (y_ab_nchw.shape, r_ab.shape)
    assert jnp.allclose(y_ab_nchw, r_ab, atol=5e-2, rtol=5e-2), \
        float(jnp.max(jnp.abs(y_ab_nchw - r_ab)))

    print("KERNEL_OK")
</pallas_src>

<mosaic_0001>
module attributes {stable_mosaic.version = 11 : i64} {
  func.func @_gemm_bias_silu_kernel(%arg0: i32, %arg1: i32, %arg2: i32, %arg3: memref<256x128xbf16, #tpu.memory_space<vmem>>, %arg4: memref<128x128xbf16, #tpu.memory_space<vmem>>, %arg5: memref<1x128xf32, #tpu.memory_space<vmem>>, %arg6: memref<256x128xf32, #tpu.memory_space<vmem>>, %arg7: memref<256x128xf32, #tpu.memory_space<vmem>>) attributes {dimension_semantics = [#tpu.dimension_semantics<parallel>, #tpu.dimension_semantics<parallel>, #tpu.dimension_semantics<arbitrary>], iteration_bounds = array<i64: 2, 1, 1>, scalar_prefetch = 0 : i64, scratch_operands = 1 : i64, tpu.core_type = #tpu.core_type<tc>, window_params = [{transform_indices = @transform_0, window_bounds = array<i64: 256, 128>}, {transform_indices = @transform_1, window_bounds = array<i64: 128, 128>}, {transform_indices = @transform_2, window_bounds = array<i64: 1, 128>}, {transform_indices = @transform_3, window_bounds = array<i64: 256, 128>}]} {
    %c0 = arith.constant 0 : index
    %c0_0 = arith.constant 0 : index
    %0 = vector.load %arg3[%c0, %c0_0] : memref<256x128xbf16, #tpu.memory_space<vmem>>, vector<256x128xbf16>
    %c0_1 = arith.constant 0 : index
    %c0_2 = arith.constant 0 : index
    %1 = vector.load %arg4[%c0_1, %c0_2] : memref<128x128xbf16, #tpu.memory_space<vmem>>, vector<128x128xbf16>
    %cst = arith.constant dense<0.000000e+00> : vector<256x128xf32>
    %2 = tpu.matmul %0, %1, %cst {dimension_numbers = #tpu.dot_dimension_numbers<[1], [0], [0], [1], [0, 0, 1, 1], [], []>} : vector<256x128xbf16>, vector<128x128xbf16>, vector<256x128xf32> -> vector<256x128xf32>
    %c0_i32 = arith.constant 0 : i32
    %3 = arith.cmpi eq, %arg2, %c0_i32 : i32
    %4 = arith.extui %3 : i1 to i32
    %c0_i32_3 = arith.constant 0 : i32
    %5 = arith.cmpi ne, %4, %c0_i32_3 : i32
    scf.if %5 {
      %c0_8 = arith.constant 0 : index
      %c0_9 = arith.constant 0 : index
      %12 = vector.load %arg7[%c0_8, %c0_9] : memref<256x128xf32, #tpu.memory_space<vmem>>, vector<256x128xf32>
      tpu.vector_store %arg7[%c0_8, %c0_9], %2 {strides = array<i32>} : memref<256x128xf32, #tpu.memory_space<vmem>>, vector<256x128xf32>,
    } else {
    }
    %c0_i32_4 = arith.constant 0 : i32
    %6 = arith.cmpi sgt, %arg2, %c0_i32_4 : i32
    %7 = arith.extui %6 : i1 to i32
    %c0_i32_5 = arith.constant 0 : i32
    %8 = arith.cmpi ne, %7, %c0_i32_5 : i32
    scf.if %8 {
      %c0_8 = arith.constant 0 : index
      %c0_9 = arith.constant 0 : index
      %12 = vector.load %arg7[%c0_8, %c0_9] : memref<256x128xf32, #tpu.memory_space<vmem>>, vector<256x128xf32>
      %13 = arith.addf %12, %2 : vector<256x128xf32>
      %c0_10 = arith.constant 0 : index
      %c0_11 = arith.constant 0 : index
      %14 = vector.load %arg7[%c0_10, %c0_11] : memref<256x128xf32, #tpu.memory_space<vmem>>, vector<256x128xf32>
      tpu.vector_store %arg7[%c0_10, %c0_11], %13 {strides = array<i32>} : memref<256x128xf32, #tpu.memory_space<vmem>>, vector<256x128xf32>,
    } else {
    }
    %c0_i32_6 = arith.constant 0 : i32
    %9 = arith.cmpi eq, %arg2, %c0_i32_6 : i32
    %10 = arith.extui %9 : i1 to i32
    %c0_i32_7 = arith.constant 0 : i32
    %11 = arith.cmpi ne, %10, %c0_i32_7 : i32
    scf.if %11 {
      %c0_8 = arith.constant 0 : index
      %c0_9 = arith.constant 0 : index
      %12 = vector.load %arg7[%c0_8, %c0_9] : memref<256x128xf32, #tpu.memory_space<vmem>>, vector<256x128xf32>
      %c0_10 = arith.constant 0 : index
      %c0_11 = arith.constant 0 : index
      %13 = vector.load %arg5[%c0_10, %c0_11] : memref<1x128xf32, #tpu.memory_space<vmem>>, vector<1x128xf32>
      %14 = vector.broadcast %13 : vector<1x128xf32> to vector<256x128xf32>
      %15 = arith.addf %12, %14 : vector<256x128xf32>
      %16 = arith.negf %15 : vector<256x128xf32>
      %17 = math.exp %16 : vector<256x128xf32>
      %cst_12 = arith.constant 1.000000e+00 : f32
      %18 = vector.broadcast %cst_12 : f32 to vector<256x128xf32>
      %19 = arith.addf %18, %17 : vector<256x128xf32>
      %20 = arith.divf %18, %19 : vector<256x128xf32>
      %21 = arith.mulf %15, %20 : vector<256x128xf32>
      %c0_13 = arith.constant 0 : index
      %c0_14 = arith.constant 0 : index
      %22 = vector.load %arg6[%c0_13, %c0_14] : memref<256x128xf32, #tpu.memory_space<vmem>>, vector<256x128xf32>
      tpu.vector_store %arg6[%c0_13, %c0_14], %21 {strides = array<i32>} : memref<256x128xf32, #tpu.memory_space<vmem>>, vector<256x128xf32>,
    } else {
    }
    return
  }
  func.func @transform_0(%arg0: i32, %arg1: i32, %arg2: i32) -> (i32, i32) {
    %c0_i32 = arith.constant 0 : i32
    return %arg0, %arg2 : i32, i32
  }
  func.func @transform_1(%arg0: i32, %arg1: i32, %arg2: i32) -> (i32, i32) {
    %c0_i32 = arith.constant 0 : i32
    return %arg2, %arg1 : i32, i32
  }
  func.func @transform_2(%arg0: i32, %arg1: i32, %arg2: i32) -> (i32, i32) {
    %c0_i32 = arith.constant 0 : i32
    %c0_i32_0 = arith.constant 0 : i32
    return %c0_i32, %arg1 : i32, i32
  }
  func.func @transform_3(%arg0: i32, %arg1: i32, %arg2: i32) -> (i32, i32) {
    %c0_i32 = arith.constant 0 : i32
    return %arg0, %arg1 : i32, i32
  }
}

</mosaic_0001>

<llo_original>
// kernel: tpu_custom_call.1
$region0: #{tpu_custom_call.1}
  #allocation0 [shape = 'u32[]', space=smem, size = 0x4, offset = 0x4, fixed_abs, tag = 'smem constant byte address 0x4 - core index']
  #allocation1 [shape = 'u32[144,128]{1,0:T(1,128)}', space=vmem, size = 0x12000, scoped, tag = 'internal scratch']
  #allocation2 [shape = 'f32[256,128]{1,0:T(8,128)}', space=vmem, size = 0x20000, scoped, tag = 'scratch operand']
  %s0 = inlined_call_operand.hbm [shape: bf16[512,128], index: 0, kind: input, shape index: {}]
  %s1 = inlined_call_operand.hbm [shape: bf16[128,128], index: 1, kind: input, shape index: {}]
  %s2 = inlined_call_operand.vmem [shape: f32[1,128], index: 2, kind: input, shape index: {}]
  %s3 = inlined_call_operand.hbm [shape: f32[512,128], index: 3, kind: output, shape index: {}]
  %s4 = sld [smem:[#allocation0]]
  $region65: #{tpu_custom_call.1} parent=0
    _
  %s6 = ssub.s32 1, %s4
  %s7 = scalar_select 0, %s6, %s4
  $region1: #{tpu_custom_call.1} parent=0
    #allocation3 [shape = 'u8[131072]{0}', space=vmem, size = 0x20000, scoped, tag = 'input window, operand 0']
    #allocation4 [shape = 's32[2]{0}', space=sflag, size = 0x8, scoped, tag = 'scoped memory for tpu_custom_call.1']
    #allocation5 [shape = 's32[2]{0}', space=sflag, size = 0x8, scoped, tag = 'scoped memory for tpu_custom_call.1']
    #allocation6 [shape = 'u8[32768]{0}', space=vmem, size = 0x8000, scoped, tag = 'input window, operand 1, single buffered']
    #allocation7 [shape = 's32[1]{0}', space=sflag, size = 0x4, scoped, tag = 'scoped memory for tpu_custom_call.1']
    #allocation8 [shape = 'u8[262144]{0}', space=vmem, size = 0x40000, scoped, tag = 'output window, operand 0']
    %8 = vsyncpa [#allocation4], 0
    %s9 = scalar_lea.sflag [#allocation4], 1
    %10 = vsyncpa %s9, 0
    %11 = vsyncpa [#allocation7], 0
    %12 = vsyncpa [#allocation5], 0
    %s13 = scalar_lea.sflag [#allocation5], 1
    %14 = vsyncpa %s13, 0
    loop: start=0, step=1, limit=4
    $region2: #{tpu_custom_call.1} parent=1 // loop_pre_header
      _
    $region3: #{tpu_custom_call.1} parent=1 // loop_header
      %s16 = sphi 0, %s20
      %p17 = scmp.ge.s32.totalorder %s16, 4
      %s23 = sphi 0, %s42
      %s24 = sphi 0, %s38
      %s25 = sphi 0, %s34
      %s26 = sphi 0, %s23
      %s27 = sphi 0, %s24
      %s28 = sphi 0, %s25
      %s29 = sphi 0, %s26
      %s30 = sphi 0, %s27
      %s31 = sphi 0, %s28
      %s47 = sphi 0, %s49
      %s50 = sphi 0, %s47
      %s51 = sphi 0, %s50
      %s67 = sphi 0, %s51
      %s75 = sphi 0, %s77
      %s78 = sphi 0, %s75
      %s79 = sphi 0, %s78
      %s95 = sphi 0, %s79
      %s101 = sphi 0, %s103
      %s104 = sphi 0, %s101
      %s105 = sphi 0, %s104
      %s121 = sphi 0, %s105
      %s129 = sphi 0, %s131
      %s132 = sphi 0, %s129
      %s133 = sphi 0, %s132
      %s149 = sphi 0, %s133
    $region4: #{tpu_custom_call.1} parent=1 // loop_header_branch
      %19 = sbr.rel (%p17) target = $region8
    $region5: #{tpu_custom_call.1} parent=1 // loop_body
      %s21 = ssub.s32 %s16, 1
      %s22 = ssub.s32 %s16, 2
      %s32 = sadd.s32 1, %s25
      %p33 = scmp.ge.s32.totalorder %s32, 1
      %s34 = scalar_select %p33, 0, %s32
      %s35 = sadd.s32 1, %s24
      %s36 = scalar_select %p33, %s35, %s24
      %p37 = scmp.ge.s32.totalorder %s36, 1
      %s38 = scalar_select %p37, 0, %s36
      %s39 = sadd.s32 1, %s23
      %s40 = scalar_select %p37, %s39, %s23
      %p41 = scmp.ge.s32.totalorder %s40, 2
      %s42 = scalar_select %p41, 0, %s40
      %s43 = ssub.s32 %s23, %s42
      %s44 = ssub.s32 %s25, %s34
      %s45 = sor.u32 %s43, %s44
      %p46 = scmp.eq.s32.totalorder %s45, 0
      %s48 = sadd.s32 %s47, 1
      %s49 = scalar_select %p46, %s47, %s48
      %p52 = pneg %p46
      %p53 = scmp.eq.s32.totalorder %s16, 1
      %p54 = por %p52, %p53
      %p55 = scmp.ne.s32.totalorder %s47, %s50
      %p56 = scmp.eq.s32.totalorder %s16, 0
      %p57 = por %p55, %p56
      %p58 = scmp.ne.s32.totalorder %s47, %s50
      %p59 = scmp.eq.s32.totalorder %s21, 1
      %p60 = por %p58, %p59
      %p61 = scmp.ne.s32.totalorder %s50, %s51
      %p62 = scmp.eq.s32.totalorder %s21, 0
      %p63 = por %p61, %p62
      %p64 = scmp.ne.s32.totalorder %s50, %s51
      %p65 = scmp.eq.s32.totalorder %s22, 1
      %p66 = por %p64, %p65
      %p68 = scmp.ne.s32.totalorder %s51, %s67
      %p69 = scmp.eq.s32.totalorder %s22, 0
      %p70 = por %p68, %p69
      %s71 = ssub.s32 %s25, %s34
      %s72 = ssub.s32 %s24, %s38
      %s73 = sor.u32 %s71, %s72
      %p74 = scmp.eq.s32.totalorder %s73, 0
      %s76 = sadd.s32 %s75, 1
      %s77 = scalar_select %p74, %s75, %s76
      %p80 = pneg %p74
      %p81 = scmp.eq.s32.totalorder %s16, 1
      %p82 = por %p80, %p81
      %p83 = scmp.ne.s32.totalorder %s75, %s78
      %p84 = scmp.eq.s32.totalorder %s16, 0
      %p85 = por %p83, %p84
      %p86 = scmp.ne.s32.totalorder %s75, %s78
      %p87 = scmp.eq.s32.totalorder %s21, 1
      %p88 = por %p86, %p87
      %p89 = scmp.ne.s32.totalorder %s78, %s79
      %p90 = scmp.eq.s32.totalorder %s21, 0
      %p91 = por %p89, %p90
      %p92 = scmp.ne.s32.totalorder %s78, %s79
      %p93 = scmp.eq.s32.totalorder %s22, 1
      %p94 = por %p92, %p93
      %p96 = scmp.ne.s32.totalorder %s79, %s95
      %p97 = scmp.eq.s32.totalorder %s22, 0
      %p98 = por %p96, %p97
      %s99 = ssub.s32 %s24, %s38
      %p100 = scmp.eq.s32.totalorder %s99, 0
      %s102 = sadd.s32 %s101, 1
      %s103 = scalar_select %p100, %s101, %s102
      %p106 = pneg %p100
      %p107 = scmp.eq.s32.totalorder %s16, 1
      %p108 = por %p106, %p107
      %p109 = scmp.ne.s32.totalorder %s101, %s104
      %p110 = scmp.eq.s32.totalorder %s16, 0
      %p111 = por %p109, %p110
      %p112 = scmp.ne.s32.totalorder %s101, %s104
      %p113 = scmp.eq.s32.totalorder %s21, 1
      %p114 = por %p112, %p113
      %p115 = scmp.ne.s32.totalorder %s104, %s105
      %p116 = scmp.eq.s32.totalorder %s21, 0
      %p117 = por %p115, %p116
      %p118 = scmp.ne.s32.totalorder %s104, %s105
      %p119 = scmp.eq.s32.totalorder %s22, 1
      %p120 = por %p118, %p119
      %p122 = scmp.ne.s32.totalorder %s105, %s121
      %p123 = scmp.eq.s32.totalorder %s22, 0
      %p124 = por %p122, %p123
      %s125 = ssub.s32 %s23, %s42
      %s126 = ssub.s32 %s24, %s38
      %s127 = sor.u32 %s125, %s126
      %p128 = scmp.eq.s32.totalorder %s127, 0
      %s130 = sadd.s32 %s129, 1
      %s131 = scalar_select %p128, %s129, %s130
      %p134 = pneg %p128
      %p135 = scmp.eq.s32.totalorder %s16, 1
      %p136 = por %p134, %p135
      %p137 = scmp.ne.s32.totalorder %s129, %s132
      %p138 = scmp.eq.s32.totalorder %s16, 0
      %p139 = por %p137, %p138
      %p140 = scmp.ne.s32.totalorder %s129, %s132
      %p141 = scmp.eq.s32.totalorder %s21, 1
      %p142 = por %p140, %p141
      %p143 = scmp.ne.s32.totalorder %s132, %s133
      %p144 = scmp.eq.s32.totalorder %s21, 0
      %p145 = por %p143, %p144
      %p146 = scmp.ne.s32.totalorder %s132, %s133
      %p147 = scmp.eq.s32.totalorder %s22, 1
      %p148 = por %p146, %p147
      %p150 = scmp.ne.s32.totalorder %s133, %s149
      %p151 = scmp.eq.s32.totalorder %s22, 0
      %p152 = por %p150, %p151
      %p153 = scmp.le.s32.totalorder 1, %s16
      %p154 = scmp.lt.s32.totalorder %s16, 3
      %p155 = pnand %p153, %p154
      %p156 = pneg %p155
      // Predicated region
      $region9: #{tpu_custom_call.1} parent=5 // pred_check
        _
      $region10: #{tpu_custom_call.1} parent=5 // pred_check_branch
        %158 = sbr.rel (%p155) target = $region12
      $region11: #{tpu_custom_call.1} parent=5 // pred_region
        %s159 = ssub.s32 %s16, 1
        // Predicated region
        $region13: #{tpu_custom_call.1} parent=11 // pred_check
          %p160 = pneg %p91
        $region14: #{tpu_custom_call.1} parent=11 // pred_check_branch
          %162 = sbr.rel (%p160) target = $region16
        $region15: #{tpu_custom_call.1} parent=11 // pred_region
          %s163 = smul.u32 16, %s28
          %s165 = ssub.s32 1024, 1024
          %166 = vsyncadd [#allocation7], %s165
          %s167 = sadd.s32 %s27, %s163
          %s168 = smul.addr %s167, 64
          %s169 = scalar_lea.hbm %s1, %s168
          %s170 = sshll.u32 [#allocation6], 4
          %s171 = int_to_ptr.vmem [resolvable:$true] %s170
          %176 = dma.hbm_to_vmem [thread:$0]  %s169, 1024, %s171, [#allocation7], 64, 64, 4
        $region16: #{tpu_custom_call.1} parent=11 // pred_fallthru
          _
        // Predicated region
        $region17: #{tpu_custom_call.1} parent=11 // pred_check
          %p177 = pneg %p117
        $region18: #{tpu_custom_call.1} parent=11 // pred_check_branch
          %179 = sbr.rel (%p177) target = $region20
        $region19: #{tpu_custom_call.1} parent=11 // pred_region
          %p180 = scmp.lt.s32.totalorder %s27, 0
          %s181 = scalar_select %p180, %s27, 0
          %s182 = scalar_lea.vmem %s2, %s181
        $region20: #{tpu_custom_call.1} parent=11 // pred_fallthru
          _
      $region12: #{tpu_custom_call.1} parent=5 // pred_fallthru
        _
      %p183 = scmp.lt.s32.totalorder %s16, 2
      // Predicated region
      $region21: #{tpu_custom_call.1} parent=5 // pred_check
        %p184 = pneg %p183
      $region22: #{tpu_custom_call.1} parent=5 // pred_check_branch
        %186 = sbr.rel (%p184) target = $region24
      $region23: #{tpu_custom_call.1} parent=5 // pred_region
        // Predicated region
        $region25: #{tpu_custom_call.1} parent=23 // pred_check
          %p187 = pneg %p57
        $region26: #{tpu_custom_call.1} parent=23 // pred_check_branch
          %189 = sbr.rel (%p187) target = $region28
        $region27: #{tpu_custom_call.1} parent=23 // pred_region
          %s190 = sand.u32 %s47, 1
          %s191 = scalar_lea.sflag [#allocation4], %s190
          %s192 = sand.u32 %s47, 1
          %s193 = smul.addr %s192, 128
          %s194 = scalar_lea.vmem [#allocation3], %s193
          %s195 = smul.u32 32, %s23
          %s197 = ssub.s32 2048, 2048
          %198 = vsyncadd %s191, %s197
          %s199 = sadd.s32 %s25, %s195
          %s200 = smul.addr %s199, 64
          %s201 = scalar_lea.hbm %s0, %s200
          %s202 = sshll.u32 %s194, 4
          %s203 = int_to_ptr.vmem [resolvable:$true] %s202
          %208 = dma.hbm_to_vmem [thread:$0]  %s201, 2048, %s203, %s191, 64, 64, 4
        $region28: #{tpu_custom_call.1} parent=23 // pred_fallthru
          _
      $region24: #{tpu_custom_call.1} parent=5 // pred_fallthru
        _
      %p209 = scmp.le.s32.totalorder 1, %s16
      %p210 = scmp.lt.s32.totalorder %s16, 3
      %p211 = pnand %p209, %p210
      %p212 = pneg %p211
      // Predicated region
      $region29: #{tpu_custom_call.1} parent=5 // pred_check
        _
      $region30: #{tpu_custom_call.1} parent=5 // pred_check_branch
        %214 = sbr.rel (%p211) target = $region32
      $region31: #{tpu_custom_call.1} parent=5 // pred_region
        %s215 = ssub.s32 %s16, 1
        %s216 = sand.u32 %s50, 1
        %s217 = scalar_lea.sflag [#allocation4], %s216
        %s218 = sand.u32 %s50, 1
        %s219 = smul.addr %s218, 128
        %s220 = scalar_lea.vmem [#allocation3], %s219
        // Predicated region
        $region33: #{tpu_custom_call.1} parent=31 // pred_check
          %p221 = pneg %p63
        $region34: #{tpu_custom_call.1} parent=31 // pred_check_branch
          %223 = sbr.rel (%p221) target = $region36
        $region35: #{tpu_custom_call.1} parent=31 // pred_region
          %224 = dma.done %s217, 2048
        $region36: #{tpu_custom_call.1} parent=31 // pred_fallthru
          _
        // Predicated region
        $region37: #{tpu_custom_call.1} parent=31 // pred_check
          %p225 = pneg %p91
        $region38: #{tpu_custom_call.1} parent=31 // pred_check_branch
          %227 = sbr.rel (%p225) target = $region40
        $region39: #{tpu_custom_call.1} parent=31 // pred_region
          %228 = dma.done [#allocation7], 1024
        $region40: #{tpu_custom_call.1} parent=31 // pred_fallthru
          _
        %s229 = sand.u32 %s50, 1
        %s230 = scalar_lea.sflag [#allocation4], %s229
        %s231 = sand.u32 %s50, 1
        %s232 = smul.addr %s231, 128
        %s233 = scalar_lea.vmem [#allocation3], %s232
        %p234 = pneg %p63
        %p235 = pneg %p60
        %p236 = pneg %p91
        %p237 = pneg %p88
        %p238 = scmp.lt.s32.totalorder %s27, 0
        %s239 = scalar_select %p238, %s27, 0
        %s240 = scalar_lea.vmem %s2, %s239
        %p241 = pneg %p117
        %p242 = pneg %p114
        %p243 = pneg %p145
        %p244 = pneg %p142
        %s245 = sand.u32 %s132, 1
        %s246 = scalar_lea.sflag [#allocation5], %s245
        %s247 = sand.u32 %s132, 1
        %s248 = smul.addr %s247, 256
        %s249 = scalar_lea.vmem [#allocation8], %s248
        %s250 = smul.u32 32, %s26
        %s251 = smul.u32 16, %s28
        %p252 = scmp.lt.s32.totalorder %s27, 0
        %s253 = scalar_select %p252, %s27, 0
        %s254 = scalar_lea.vmem %s2, %s253
        %s255 = smul.u32 32, %s26
        %v257 = vld [vmem:[%s220] sm:$0xf]
        %v258 = vld [vmem:[%s220 + $0x4] sm:$0xf]
        %v259 = vld [vmem:[%s220 + $0x8] sm:$0xf]
        %v260 = vld [vmem:[%s220 + $0xc] sm:$0xf]
        %v261 = vld [vmem:[%s220 + $0x10] sm:$0xf]
        %v262 = vld [vmem:[%s220 + $0x14] sm:$0xf]
        %v263 = vld [vmem:[%s220 + $0x18] sm:$0xf]
        %v264 = vld [vmem:[%s220 + $0x1c] sm:$0xf]
        %v265 = vld [vmem:[%s220 + $0x20] sm:$0xf]
        %v266 = vld [vmem:[%s220 + $0x24] sm:$0xf]
        %v267 = vld [vmem:[%s220 + $0x28] sm:$0xf]
        %v268 = vld [vmem:[%s220 + $0x2c] sm:$0xf]
        %v269 = vld [vmem:[%s220 + $0x30] sm:$0xf]
        %v270 = vld [vmem:[%s220 + $0x34] sm:$0xf]
        %v271 = vld [vmem:[%s220 + $0x38] sm:$0xf]
        %v272 = vld [vmem:[%s220 + $0x3c] sm:$0xf]
        %v273 = vld [vmem:[%s220 + $0x40] sm:$0xf]
        %v274 = vld [vmem:[%s220 + $0x44] sm:$0xf]
        %v275 = vld [vmem:[%s220 + $0x48] sm:$0xf]
        %v276 = vld [vmem:[%s220 + $0x4c] sm:$0xf]
        %v277 = vld [vmem:[%s220 + $0x50] sm:$0xf]
        %v278 = vld [vmem:[%s220 + $0x54] sm:$0xf]
        %v279 = vld [vmem:[%s220 + $0x58] sm:$0xf]
        %v280 = vld [vmem:[%s220 + $0x5c] sm:$0xf]
        %v281 = vld [vmem:[%s220 + $0x60] sm:$0xf]
        %v282 = vld [vmem:[%s220 + $0x64] sm:$0xf]
        %v283 = vld [vmem:[%s220 + $0x68] sm:$0xf]
        %v284 = vld [vmem:[%s220 + $0x6c] sm:$0xf]
        %v285 = vld [vmem:[%s220 + $0x70] sm:$0xf]
        %v286 = vld [vmem:[%s220 + $0x74] sm:$0xf]
        %v287 = vld [vmem:[%s220 + $0x78] sm:$0xf]
        %v288 = vld [vmem:[%s220 + $0x7c] sm:$0xf]
        %v289 = vld [vmem:[#allocation6] sm:$0xf]
        %v290 = vld [vmem:[#allocation6 + $0x4] sm:$0xf]
        %v291 = vld [vmem:[#allocation6 + $0x8] sm:$0xf]
        %v292 = vld [vmem:[#allocation6 + $0xc] sm:$0xf]
        %v293 = vld [vmem:[#allocation6 + $0x10] sm:$0xf]
        %v294 = vld [vmem:[#allocation6 + $0x14] sm:$0xf]
        %v295 = vld [vmem:[#allocation6 + $0x18] sm:$0xf]
        %v296 = vld [vmem:[#allocation6 + $0x1c] sm:$0xf]
        %v297 = vld [vmem:[#allocation6 + $0x20] sm:$0xf]
        %v298 = vld [vmem:[#allocation6 + $0x24] sm:$0xf]
        %v299 = vld [vmem:[#allocation6 + $0x28] sm:$0xf]
        %v300 = vld [vmem:[#allocation6 + $0x2c] sm:$0xf]
        %v301 = vld [vmem:[#allocation6 + $0x30] sm:$0xf]
        %v302 = vld [vmem:[#allocation6 + $0x34] sm:$0xf]
        %v303 = vld [vmem:[#allocation6 + $0x38] sm:$0xf]
        %v304 = vld [vmem:[#allocation6 + $0x3c] sm:$0xf]
        %v337 = vunpack.c.l.b16 %v257
        %v338 = vunpack.c.l.b16 %v258
        %v339 = vunpack.c.l.b16 %v259
        %v340 = vunpack.c.l.b16 %v260
        %v341 = vunpack.c.l.b16 %v261
        %v342 = vunpack.c.l.b16 %v262
        %v343 = vunpack.c.l.b16 %v263
        %v344 = vunpack.c.l.b16 %v264
        %v345 = vunpack.c.l.b16 %v265
        %v346 = vunpack.c.l.b16 %v266
        %v347 = vunpack.c.l.b16 %v267
        %v348 = vunpack.c.l.b16 %v268
        %v349 = vunpack.c.l.b16 %v269
        %v350 = vunpack.c.l.b16 %v270
        %v351 = vunpack.c.l.b16 %v271
        %v352 = vunpack.c.l.b16 %v272
        %v353 = vunpack.c.l.b16 %v273
        %v354 = vunpack.c.l.b16 %v274
        %v355 = vunpack.c.l.b16 %v275
        %v356 = vunpack.c.l.b16 %v276
        %v357 = vunpack.c.l.b16 %v277
        %v358 = vunpack.c.l.b16 %v278
        %v359 = vunpack.c.l.b16 %v279
        %v360 = vunpack.c.l.b16 %v280
        %v361 = vunpack.c.l.b16 %v281
        %v362 = vunpack.c.l.b16 %v282
        %v363 = vunpack.c.l.b16 %v283
        %v364 = vunpack.c.l.b16 %v284
        %v365 = vunpack.c.l.b16 %v285
        %v366 = vunpack.c.l.b16 %v286
        %v367 = vunpack.c.l.b16 %v287
        %v368 = vunpack.c.l.b16 %v288
        %v369 = vpack.c.b16 %v338, %v337
        %v370 = vpack.c.b16 %v340, %v339
        %v371 = vpack.c.b16 %v342, %v341
        %v372 = vpack.c.b16 %v344, %v343
        %v373 = vpack.c.b16 %v346, %v345
        %v374 = vpack.c.b16 %v348, %v347
        %v375 = vpack.c.b16 %v350, %v349
        %v376 = vpack.c.b16 %v352, %v351
        %v377 = vpack.c.b16 %v354, %v353
        %v378 = vpack.c.b16 %v356, %v355
        %v379 = vpack.c.b16 %v358, %v357
        %v380 = vpack.c.b16 %v360, %v359
        %v381 = vpack.c.b16 %v362, %v361
        %v382 = vpack.c.b16 %v364, %v363
        %v383 = vpack.c.b16 %v366, %v365
        %v384 = vpack.c.b16 %v368, %v367
        %v417 = vunpack.c.l.b16 %v289
        %v418 = vunpack.c.l.b16 %v290
        %v419 = vunpack.c.l.b16 %v291
        %v420 = vunpack.c.l.b16 %v292
        %v421 = vunpack.c.l.b16 %v293
        %v422 = vunpack.c.l.b16 %v294
        %v423 = vunpack.c.l.b16 %v295
        %v424 = vunpack.c.l.b16 %v296
        %v425 = vunpack.c.l.b16 %v297
        %v426 = vunpack.c.l.b16 %v298
        %v427 = vunpack.c.l.b16 %v299
        %v428 = vunpack.c.l.b16 %v300
        %v429 = vunpack.c.l.b16 %v301
        %v430 = vunpack.c.l.b16 %v302
        %v431 = vunpack.c.l.b16 %v303
        %v432 = vunpack.c.l.b16 %v304
        %v433 = vpack.c.b16 %v418, %v417
        %v434 = vpack.c.b16 %v420, %v419
        %v435 = vpack.c.b16 %v422, %v421
        %v436 = vpack.c.b16 %v424, %v423
        %v437 = vpack.c.b16 %v426, %v425
        %v438 = vpack.c.b16 %v428, %v427
        %v439 = vpack.c.b16 %v430, %v429
        %v440 = vpack.c.b16 %v432, %v431
        %449 = vmatprep.subr.bf16.mxu0 0
        %450 = vmatpush1.bf16.msra.mxu0 %v433
        %451 = vmatprep.subr.bf16.mxu0 0
        %452 = vmatpush1.bf16.msra.mxu0 %v434
        %453 = vmatprep.subr.bf16.mxu0 0
        %454 = vmatpush1.bf16.msra.mxu0 %v435
        %455 = vmatprep.subr.bf16.mxu0 0
        %456 = vmatpush1.bf16.msra.mxu0 %v436
        %457 = vmatprep.subr.bf16.mxu0 0
        %458 = vmatpush1.bf16.msra.mxu0 %v437
        %459 = vmatprep.subr.bf16.mxu0 0
        %460 = vmatpush1.bf16.msra.mxu0 %v438
        %461 = vmatprep.subr.bf16.mxu0 0
        %462 = vmatpush1.bf16.msra.mxu0 %v439
        %463 = vmatprep.subr.bf16.mxu0 0
        %464 = vmatpush1.bf16.msra.mxu0 %v440
        %465 = vmatprep.subr.bf16.mxu0 0
        %466 = vmatpush1.bf16.msra.mxu0 0
        %467 = vmatprep.subr.bf16.mxu0 0
        %468 = vmatpush1.bf16.msra.mxu0 0
        %469 = vmatprep.subr.bf16.mxu0 0
        %470 = vmatpush1.bf16.msra.mxu0 0
        %471 = vmatprep.subr.bf16.mxu0 0
        %472 = vmatpush1.bf16.msra.mxu0 0
        %473 = vmatprep.subr.bf16.mxu0 0
        %474 = vmatpush1.bf16.msra.mxu0 0
        %475 = vmatprep.subr.bf16.mxu0 0
        %476 = vmatpush1.bf16.msra.mxu0 0
        %477 = vmatprep.subr.bf16.mxu0 0
        %478 = vmatpush1.bf16.msra.mxu0 0
        %479 = vmatprep.subr.bf16.mxu0 0
        %480 = vmatpush1.bf16.msra.mxu0 0
        %481 = vmatprep.mubr.bf16.mxu0 0
        %482 = vmatmul.mubr.bf16.gmra.mrb[0].mxu0 %v369
        %v483 = vpop.f32.mrb[0].mxu0
        %v484 = vadd.f32 0.0, %v483
        %v485 = vpop.f32.mrb[0].mxu0
        %v486 = vpop.f32.mrb[0].mxu0
        %v487 = vadd.f32 0.0, %v486
        %v488 = vpop.f32.mrb[0].mxu0
        %489 = vmatprep.mubr.bf16.mxu0 0
        %490 = vmatmul.mubr.bf16.gmra.mrb[0].mxu0 %v370
        %v491 = vpop.f32.mrb[0].mxu0
        %v492 = vadd.f32 0.0, %v491
        %v493 = vpop.f32.mrb[0].mxu0
        %v494 = vpop.f32.mrb[0].mxu0
        %v495 = vadd.f32 0.0, %v494
        %v496 = vpop.f32.mrb[0].mxu0
        %497 = vmatprep.mubr.bf16.mxu0 0
        %498 = vmatmul.mubr.bf16.gmra.mrb[0].mxu0 %v371
        %v499 = vpop.f32.mrb[0].mxu0
        %v500 = vadd.f32 0.0, %v499
        %v501 = vpop.f32.mrb[0].mxu0
        %v502 = vpop.f32.mrb[0].mxu0
        %v503 = vadd.f32 0.0, %v502
        %v504 = vpop.f32.mrb[0].mxu0
        %505 = vmatprep.mubr.bf16.mxu0 0
        %506 = vmatmul.mubr.bf16.gmra.mrb[0].mxu0 %v372
        %v507 = vpop.f32.mrb[0].mxu0
        %v508 = vadd.f32 0.0, %v507
        %v509 = vpop.f32.mrb[0].mxu0
        %v510 = vpop.f32.mrb[0].mxu0
        %v511 = vadd.f32 0.0, %v510
        %v512 = vpop.f32.mrb[0].mxu0
        %513 = vmatprep.mubr.bf16.mxu0 0
        %514 = vmatmul.mubr.bf16.gmra.mrb[0].mxu0 %v373
        %v515 = vpop.f32.mrb[0].mxu0
        %v516 = vadd.f32 0.0, %v515
        %v517 = vpop.f32.mrb[0].mxu0
        %v518 = vpop.f32.mrb[0].mxu0
        %v519 = vadd.f32 0.0, %v518
        %v520 = vpop.f32.mrb[0].mxu0
        %521 = vmatprep.mubr.bf16.mxu0 0
        %522 = vmatmul.mubr.bf16.gmra.mrb[0].mxu0 %v374
        %v523 = vpop.f32.mrb[0].mxu0
        %v524 = vadd.f32 0.0, %v523
        %v525 = vpop.f32.mrb[0].mxu0
        %v526 = vpop.f32.mrb[0].mxu0
        %v527 = vadd.f32 0.0, %v526
        %v528 = vpop.f32.mrb[0].mxu0
        %529 = vmatprep.mubr.bf16.mxu0 0
        %530 = vmatmul.mubr.bf16.gmra.mrb[0].mxu0 %v375
        %v531 = vpop.f32.mrb[0].mxu0
        %v532 = vadd.f32 0.0, %v531
        %v533 = vpop.f32.mrb[0].mxu0
        %v534 = vpop.f32.mrb[0].mxu0
        %v535 = vadd.f32 0.0, %v534
        %v536 = vpop.f32.mrb[0].mxu0
        %537 = vmatprep.mubr.bf16.mxu0 0
        %538 = vmatmul.mubr.bf16.gmra.mrb[0].mxu0 %v376
        %v539 = vpop.f32.mrb[0].mxu0
        %v540 = vadd.f32 0.0, %v539
        %v541 = vpop.f32.mrb[0].mxu0
        %v542 = vpop.f32.mrb[0].mxu0
        %v543 = vadd.f32 0.0, %v542
        %v544 = vpop.f32.mrb[0].mxu0
        %545 = vmatprep.mubr.bf16.mxu0 0
        %546 = vmatmul.mubr.bf16.gmra.mrb[0].mxu0 %v377
        %v547 = vpop.f32.mrb[0].mxu0
        %v548 = vadd.f32 0.0, %v547
        %v549 = vpop.f32.mrb[0].mxu0
        %v550 = vpop.f32.mrb[0].mxu0
        %v551 = vadd.f32 0.0, %v550
        %v552 = vpop.f32.mrb[0].mxu0
        %553 = vmatprep.mubr.bf16.mxu0 0
        %554 = vmatmul.mubr.bf16.gmra.mrb[0].mxu0 %v378
        %v555 = vpop.f32.mrb[0].mxu0
        %v556 = vadd.f32 0.0, %v555
        %v557 = vpop.f32.mrb[0].mxu0
        %v558 = vpop.f32.mrb[0].mxu0
        %v559 = vadd.f32 0.0, %v558
        %v560 = vpop.f32.mrb[0].mxu0
        %561 = vmatprep.mubr.bf16.mxu0 0
        %562 = vmatmul.mubr.bf16.gmra.mrb[0].mxu0 %v379
        %v563 = vpop.f32.mrb[0].mxu0
        %v564 = vadd.f32 0.0, %v563
        %v565 = vpop.f32.mrb[0].mxu0
        %v566 = vpop.f32.mrb[0].mxu0
        %v567 = vadd.f32 0.0, %v566
        %v568 = vpop.f32.mrb[0].mxu0
        %569 = vmatprep.mubr.bf16.mxu0 0
        %570 = vmatmul.mubr.bf16.gmra.mrb[0].mxu0 %v380
        %v571 = vpop.f32.mrb[0].mxu0
        %v572 = vadd.f32 0.0, %v571
        %v573 = vpop.f32.mrb[0].mxu0
        %v574 = vpop.f32.mrb[0].mxu0
        %v575 = vadd.f32 0.0, %v574
        %v576 = vpop.f32.mrb[0].mxu0
        %577 = vmatprep.mubr.bf16.mxu0 0
        %578 = vmatmul.mubr.bf16.gmra.mrb[0].mxu0 %v381
        %v579 = vpop.f32.mrb[0].mxu0
        %v580 = vadd.f32 0.0, %v579
        %v581 = vpop.f32.mrb[0].mxu0
        %v582 = vpop.f32.mrb[0].mxu0
        %v583 = vadd.f32 0.0, %v582
        %v584 = vpop.f32.mrb[0].mxu0
        %585 = vmatprep.mubr.bf16.mxu0 0
        %586 = vmatmul.mubr.bf16.gmra.mrb[0].mxu0 %v382
        %v587 = vpop.f32.mrb[0].mxu0
        %v588 = vadd.f32 0.0, %v587
        %v589 = vpop.f32.mrb[0].mxu0
        %v590 = vpop.f32.mrb[0].mxu0
        %v591 = vadd.f32 0.0, %v590
        %v592 = vpop.f32.mrb[0].mxu0
        %593 = vmatprep.mubr.bf16.mxu0 0
        %594 = vmatmul.mubr.bf16.gmra.mrb[0].mxu0 %v383
        %v595 = vpop.f32.mrb[0].mxu0
        %v596 = vadd.f32 0.0, %v595
        %v597 = vpop.f32.mrb[0].mxu0
        %v598 = vpop.f32.mrb[0].mxu0
        %v599 = vadd.f32 0.0, %v598
        %v600 = vpop.f32.mrb[0].mxu0
        %601 = vmatprep.mubr.bf16.mxu0 0
        %602 = vmatmul.mubr.bf16.gmra.mrb[0].mxu0 %v384
        %v603 = vpop.f32.mrb[0].mxu0
        %v604 = vadd.f32 0.0, %v603
        %v605 = vpop.f32.mrb[0].mxu0
        %v606 = vpop.f32.mrb[0].mxu0
        %v607 = vadd.f32 0.0, %v606
        %v608 = vpop.f32.mrb[0].mxu0
        %609 = vdwg.mxu0
        %p610 = scmp.eq.s32.totalorder %s28, 0
        // Predicated region
        $region41: #{tpu_custom_call.1} parent=31 // pred_check
          %p611 = pneg %p610
        $region42: #{tpu_custom_call.1} parent=31 // pred_check_branch
          %613 = sbr.rel (%p611) target = $region44
        $region43: #{tpu_custom_call.1} parent=31 // pred_region
          %614 = vst [vmem:[#allocation2] sm:$0xff] %v484
          %615 = vst [vmem:[#allocation2 + $0x8] sm:$0xff] %v487
          %616 = vst [vmem:[#allocation2 + $0x10] sm:$0xff] %v492
          %617 = vst [vmem:[#allocation2 + $0x18] sm:$0xff] %v495
          %618 = vst [vmem:[#allocation2 + $0x20] sm:$0xff] %v500
          %619 = vst [vmem:[#allocation2 + $0x28] sm:$0xff] %v503
          %620 = vst [vmem:[#allocation2 + $0x30] sm:$0xff] %v508
          %621 = vst [vmem:[#allocation2 + $0x38] sm:$0xff] %v511
          %622 = vst [vmem:[#allocation2 + $0x40] sm:$0xff] %v516
          %623 = vst [vmem:[#allocation2 + $0x48] sm:$0xff] %v519
          %624 = vst [vmem:[#allocation2 + $0x50] sm:$0xff] %v524
          %625 = vst [vmem:[#allocation2 + $0x58] sm:$0xff] %v527
          %626 = vst [vmem:[#allocation2 + $0x60] sm:$0xff] %v532
          %627 = vst [vmem:[#allocation2 + $0x68] sm:$0xff] %v535
          %628 = vst [vmem:[#allocation2 + $0x70] sm:$0xff] %v540
          %629 = vst [vmem:[#allocation2 + $0x78] sm:$0xff] %v543
          %630 = vst [vmem:[#allocation2 + $0x80] sm:$0xff] %v548
          %631 = vst [vmem:[#allocation2 + $0x88] sm:$0xff] %v551
          %632 = vst [vmem:[#allocation2 + $0x90] sm:$0xff] %v556
          %633 = vst [vmem:[#allocation2 + $0x98] sm:$0xff] %v559
          %634 = vst [vmem:[#allocation2 + $0xa0] sm:$0xff] %v564
          %635 = vst [vmem:[#allocation2 + $0xa8] sm:$0xff] %v567
          %636 = vst [vmem:[#allocation2 + $0xb0] sm:$0xff] %v572
          %637 = vst [vmem:[#allocation2 + $0xb8] sm:$0xff] %v575
          %638 = vst [vmem:[#allocation2 + $0xc0] sm:$0xff] %v580
          %639 = vst [vmem:[#allocation2 + $0xc8] sm:$0xff] %v583
          %640 = vst [vmem:[#allocation2 + $0xd0] sm:$0xff] %v588
          %641 = vst [vmem:[#allocation2 + $0xd8] sm:$0xff] %v591
          %642 = vst [vmem:[#allocation2 + $0xe0] sm:$0xff] %v596
          %643 = vst [vmem:[#allocation2 + $0xe8] sm:$0xff] %v599
          %644 = vst [vmem:[#allocation2 + $0xf0] sm:$0xff] %v604
          %645 = vst [vmem:[#allocation2 + $0xf8] sm:$0xff] %v607
        $region44: #{tpu_custom_call.1} parent=31 // pred_fallthru
          _
        %p646 = scmp.gt.s32.totalorder %s28, 0
        // Predicated region
        $region45: #{tpu_custom_call.1} parent=31 // pred_check
          %p647 = pneg %p646
        $region46: #{tpu_custom_call.1} parent=31 // pred_check_branch
          %649 = sbr.rel (%p647) target = $region48
        $region47: #{tpu_custom_call.1} parent=31 // pred_region
          %v650 = vld [vmem:[#allocation2] sm:$0xff]
          %v651 = vld [vmem:[#allocation2 + $0x8] sm:$0xff]
          %v652 = vld [vmem:[#allocation2 + $0x10] sm:$0xff]
          %v653 = vld [vmem:[#allocation2 + $0x18] sm:$0xff]
          %v654 = vld [vmem:[#allocation2 + $0x20] sm:$0xff]
          %v655 = vld [vmem:[#allocation2 + $0x28] sm:$0xff]
          %v656 = vld [vmem:[#allocation2 + $0x30] sm:$0xff]
          %v657 = vld [vmem:[#allocation2 + $0x38] sm:$0xff]
          %v658 = vld [vmem:[#allocation2 + $0x40] sm:$0xff]
          %v659 = vld [vmem:[#allocation2 + $0x48] sm:$0xff]
          %v660 = vld [vmem:[#allocation2 + $0x50] sm:$0xff]
          %v661 = vld [vmem:[#allocation2 + $0x58] sm:$0xff]
          %v662 = vld [vmem:[#allocation2 + $0x60] sm:$0xff]
          %v663 = vld [vmem:[#allocation2 + $0x68] sm:$0xff]
          %v664 = vld [vmem:[#allocation2 + $0x70] sm:$0xff]
          %v665 = vld [vmem:[#allocation2 + $0x78] sm:$0xff]
          %v666 = vld [vmem:[#allocation2 + $0x80] sm:$0xff]
          %v667 = vld [vmem:[#allocation2 + $0x88] sm:$0xff]
          %v668 = vld [vmem:[#allocation2 + $0x90] sm:$0xff]
          %v669 = vld [vmem:[#allocation2 + $0x98] sm:$0xff]
          %v670 = vld [vmem:[#allocation2 + $0xa0] sm:$0xff]
          %v671 = vld [vmem:[#allocation2 + $0xa8] sm:$0xff]
          %v672 = vld [vmem:[#allocation2 + $0xb0] sm:$0xff]
          %v673 = vld [vmem:[#allocation2 + $0xb8] sm:$0xff]
          %v674 = vld [vmem:[#allocation2 + $0xc0] sm:$0xff]
          %v675 = vld [vmem:[#allocation2 + $0xc8] sm:$0xff]
          %v676 = vld [vmem:[#allocation2 + $0xd0] sm:$0xff]
          %v677 = vld [vmem:[#allocation2 + $0xd8] sm:$0xff]
          %v678 = vld [vmem:[#allocation2 + $0xe0] sm:$0xff]
          %v679 = vld [vmem:[#allocation2 + $0xe8] sm:$0xff]
          %v680 = vld [vmem:[#allocation2 + $0xf0] sm:$0xff]
          %v681 = vld [vmem:[#allocation2 + $0xf8] sm:$0xff]
          %v682 = vadd.f32 %v650, %v484
          %v683 = vadd.f32 %v651, %v487
          %v684 = vadd.f32 %v652, %v492
          %v685 = vadd.f32 %v653, %v495
          %v686 = vadd.f32 %v654, %v500
          %v687 = vadd.f32 %v655, %v503
          %v688 = vadd.f32 %v656, %v508
          %v689 = vadd.f32 %v657, %v511
          %v690 = vadd.f32 %v658, %v516
          %v691 = vadd.f32 %v659, %v519
          %v692 = vadd.f32 %v660, %v524
          %v693 = vadd.f32 %v661, %v527
          %v694 = vadd.f32 %v662, %v532
          %v695 = vadd.f32 %v663, %v535
          %v696 = vadd.f32 %v664, %v540
          %v697 = vadd.f32 %v665, %v543
          %v698 = vadd.f32 %v666, %v548
          %v699 = vadd.f32 %v667, %v551
          %v700 = vadd.f32 %v668, %v556
          %v701 = vadd.f32 %v669, %v559
          %v702 = vadd.f32 %v670, %v564
          %v703 = vadd.f32 %v671, %v567
          %v704 = vadd.f32 %v672, %v572
          %v705 = vadd.f32 %v673, %v575
          %v706 = vadd.f32 %v674, %v580
          %v707 = vadd.f32 %v675, %v583
          %v708 = vadd.f32 %v676, %v588
          %v709 = vadd.f32 %v677, %v591
          %v710 = vadd.f32 %v678, %v596
          %v711 = vadd.f32 %v679, %v599
          %v712 = vadd.f32 %v680, %v604
          %v713 = vadd.f32 %v681, %v607
          %714 = vst [vmem:[#allocation2] sm:$0xff] %v682
          %715 = vst [vmem:[#allocation2 + $0x8] sm:$0xff] %v683
          %716 = vst [vmem:[#allocation2 + $0x10] sm:$0xff] %v684
          %717 = vst [vmem:[#allocation2 + $0x18] sm:$0xff] %v685
          %718 = vst [vmem:[#allocation2 + $0x20] sm:$0xff] %v686
          %719 = vst [vmem:[#allocation2 + $0x28] sm:$0xff] %v687
          %720 = vst [vmem:[#allocation2 + $0x30] sm:$0xff] %v688
          %721 = vst [vmem:[#allocation2 + $0x38] sm:$0xff] %v689
          %722 = vst [vmem:[#allocation2 + $0x40] sm:$0xff] %v690
          %723 = vst [vmem:[#allocation2 + $0x48] sm:$0xff] %v691
          %724 = vst [vmem:[#allocation2 + $0x50] sm:$0xff] %v692
          %725 = vst [vmem:[#allocation2 + $0x58] sm:$0xff] %v693
          %726 = vst [vmem:[#allocation2 + $0x60] sm:$0xff] %v694
          %727 = vst [vmem:[#allocation2 + $0x68] sm:$0xff] %v695
          %728 = vst [vmem:[#allocation2 + $0x70] sm:$0xff] %v696
          %729 = vst [vmem:[#allocation2 + $0x78] sm:$0xff] %v697
          %730 = vst [vmem:[#allocation2 + $0x80] sm:$0xff] %v698
          %731 = vst [vmem:[#allocation2 + $0x88] sm:$0xff] %v699
          %732 = vst [vmem:[#allocation2 + $0x90] sm:$0xff] %v700
          %733 = vst [vmem:[#allocation2 + $0x98] sm:$0xff] %v701
          %734 = vst [vmem:[#allocation2 + $0xa0] sm:$0xff] %v702
          %735 = vst [vmem:[#allocation2 + $0xa8] sm:$0xff] %v703
          %736 = vst [vmem:[#allocation2 + $0xb0] sm:$0xff] %v704
          %737 = vst [vmem:[#allocation2 + $0xb8] sm:$0xff] %v705
          %738 = vst [vmem:[#allocation2 + $0xc0] sm:$0xff] %v706
          %739 = vst [vmem:[#allocation2 + $0xc8] sm:$0xff] %v707
          %740 = vst [vmem:[#allocation2 + $0xd0] sm:$0xff] %v708
          %741 = vst [vmem:[#allocation2 + $0xd8] sm:$0xff] %v709
          %742 = vst [vmem:[#allocation2 + $0xe0] sm:$0xff] %v710
          %743 = vst [vmem:[#allocation2 + $0xe8] sm:$0xff] %v711
          %744 = vst [vmem:[#allocation2 + $0xf0] sm:$0xff] %v712
          %745 = vst [vmem:[#allocation2 + $0xf8] sm:$0xff] %v713
        $region48: #{tpu_custom_call.1} parent=31 // pred_fallthru
          _
        // Predicated region
        $region49: #{tpu_custom_call.1} parent=31 // pred_check
          %p746 = pneg %p610
        $region50: #{tpu_custom_call.1} parent=31 // pred_check_branch
          %748 = sbr.rel (%p746) target = $region52
        $region51: #{tpu_custom_call.1} parent=31 // pred_region
          %v749 = vld [vmem:[#allocation2] sm:$0xff]
          %v750 = vld [vmem:[#allocation2 + $0x8] sm:$0xff]
          %v751 = vld [vmem:[#allocation2 + $0x10] sm:$0xff]
          %v752 = vld [vmem:[#allocation2 + $0x18] sm:$0xff]
          %v753 = vld [vmem:[#allocation2 + $0x20] sm:$0xff]
          %v754 = vld [vmem:[#allocation2 + $0x28] sm:$0xff]
          %v755 = vld [vmem:[#allocation2 + $0x30] sm:$0xff]
          %v756 = vld [vmem:[#allocation2 + $0x38] sm:$0xff]
          %v757 = vld [vmem:[#allocation2 + $0x40] sm:$0xff]
          %v758 = vld [vmem:[#allocation2 + $0x48] sm:$0xff]
          %v759 = vld [vmem:[#allocation2 + $0x50] sm:$0xff]
          %v760 = vld [vmem:[#allocation2 + $0x58] sm:$0xff]
          %v761 = vld [vmem:[#allocation2 + $0x60] sm:$0xff]
          %v762 = vld [vmem:[#allocation2 + $0x68] sm:$0xff]
          %v763 = vld [vmem:[#allocation2 + $0x70] sm:$0xff]
          %v764 = vld [vmem:[#allocation2 + $0x78] sm:$0xff]
          %v765 = vld [vmem:[#allocation2 + $0x80] sm:$0xff]
          %v766 = vld [vmem:[#allocation2 + $0x88] sm:$0xff]
          %v767 = vld [vmem:[#allocation2 + $0x90] sm:$0xff]
          %v768 = vld [vmem:[#allocation2 + $0x98] sm:$0xff]
          %v769 = vld [vmem:[#allocation2 + $0xa0] sm:$0xff]
          %v770 = vld [vmem:[#allocation2 + $0xa8] sm:$0xff]
          %v771 = vld [vmem:[#allocation2 + $0xb0] sm:$0xff]
          %v772 = vld [vmem:[#allocation2 + $0xb8] sm:$0xff]
          %v773 = vld [vmem:[#allocation2 + $0xc0] sm:$0xff]
          %v774 = vld [vmem:[#allocation2 + $0xc8] sm:$0xff]
          %v775 = vld [vmem:[#allocation2 + $0xd0] sm:$0xff]
          %v776 = vld [vmem:[#allocation2 + $0xd8] sm:$0xff]
          %v777 = vld [vmem:[#allocation2 + $0xe0] sm:$0xff]
          %v778 = vld [vmem:[#allocation2 + $0xe8] sm:$0xff]
          %v779 = vld [vmem:[#allocation2 + $0xf0] sm:$0xff]
          %v780 = vld [vmem:[#allocation2 + $0xf8] sm:$0xff]
          %v781 = vld [vmem:[%s254] sm:$0x1]
          %v783 = vlaneseq
          %v784 = vshrl.u32 %v783, 7
          %v785 = vsub.s32 0, %v784
          %v786 = vrot.slane %v781, %v785
          %v788 = vadd.f32 %v749, %v786
          %v789 = vadd.f32 %v750, %v786
          %v790 = vadd.f32 %v751, %v786
          %v791 = vadd.f32 %v752, %v786
          %v792 = vadd.f32 %v753, %v786
          %v793 = vadd.f32 %v754, %v786
          %v794 = vadd.f32 %v755, %v786
          %v795 = vadd.f32 %v756, %v786
          %v796 = vadd.f32 %v757, %v786
          %v797 = vadd.f32 %v758, %v786
          %v798 = vadd.f32 %v759, %v786
          %v799 = vadd.f32 %v760, %v786
          %v800 = vadd.f32 %v761, %v786
          %v801 = vadd.f32 %v762, %v786
          %v802 = vadd.f32 %v763, %v786
          %v803 = vadd.f32 %v764, %v786
          %v804 = vadd.f32 %v765, %v786
          %v805 = vadd.f32 %v766, %v786
          %v806 = vadd.f32 %v767, %v786
          %v807 = vadd.f32 %v768, %v786
          %v808 = vadd.f32 %v769, %v786
          %v809 = vadd.f32 %v770, %v786
          %v810 = vadd.f32 %v771, %v786
          %v811 = vadd.f32 %v772, %v786
          %v812 = vadd.f32 %v773, %v786
          %v813 = vadd.f32 %v774, %v786
          %v814 = vadd.f32 %v775, %v786
          %v815 = vadd.f32 %v776, %v786
          %v816 = vadd.f32 %v777, %v786
          %v817 = vadd.f32 %v778, %v786
          %v818 = vadd.f32 %v779, %v786
          %v819 = vadd.f32 %v780, %v786
          %v820 = vxor.u32 %v788, 2147483648
          %v821 = vxor.u32 %v789, 2147483648
          %v822 = vxor.u32 %v790, 2147483648
          %v823 = vxor.u32 %v791, 2147483648
          %v824 = vxor.u32 %v792, 2147483648
          %v825 = vxor.u32 %v793, 2147483648
          %v826 = vxor.u32 %v794, 2147483648
          %v827 = vxor.u32 %v795, 2147483648
          %v828 = vxor.u32 %v796, 2147483648
          %v829 = vxor.u32 %v797, 2147483648
          %v830 = vxor.u32 %v798, 2147483648
          %v831 = vxor.u32 %v799, 2147483648
          %v832 = vxor.u32 %v800, 2147483648
          %v833 = vxor.u32 %v801, 2147483648
          %v834 = vxor.u32 %v802, 2147483648
          %v835 = vxor.u32 %v803, 2147483648
          %v836 = vxor.u32 %v804, 2147483648
          %v837 = vxor.u32 %v805, 2147483648
          %v838 = vxor.u32 %v806, 2147483648
          %v839 = vxor.u32 %v807, 2147483648
          %v840 = vxor.u32 %v808, 2147483648
          %v841 = vxor.u32 %v809, 2147483648
          %v842 = vxor.u32 %v810, 2147483648
          %v843 = vxor.u32 %v811, 2147483648
          %v844 = vxor.u32 %v812, 2147483648
          %v845 = vxor.u32 %v813, 2147483648
          %v846 = vxor.u32 %v814, 2147483648
          %v847 = vxor.u32 %v815, 2147483648
          %v848 = vxor.u32 %v816, 2147483648
          %v849 = vxor.u32 %v817, 2147483648
          %v850 = vxor.u32 %v818, 2147483648
          %v851 = vxor.u32 %v819, 2147483648
          %v852 = vmul.f32 %v820, 1.442695
          %v853 = vpow.pop %v852
          %v854 = vmul.f32 %v821, 1.442695
          %v855 = vpow.pop %v854
          %v856 = vmul.f32 %v822, 1.442695
          %v857 = vpow.pop %v856
          %v858 = vmul.f32 %v823, 1.442695
          %v859 = vpow.pop %v858
          %v860 = vmul.f32 %v824, 1.442695
          %v861 = vpow.pop %v860
          %v862 = vmul.f32 %v825, 1.442695
          %v863 = vpow.pop %v862
          %v864 = vmul.f32 %v826, 1.442695
          %v865 = vpow.pop %v864
          %v866 = vmul.f32 %v827, 1.442695
          %v867 = vpow.pop %v866
          %v868 = vmul.f32 %v828, 1.442695
          %v869 = vpow.pop %v868
          %v870 = vmul.f32 %v829, 1.442695
          %v871 = vpow.pop %v870
          %v872 = vmul.f32 %v830, 1.442695
          %v873 = vpow.pop %v872
          %v874 = vmul.f32 %v831, 1.442695
          %v875 = vpow.pop %v874
          %v876 = vmul.f32 %v832, 1.442695
          %v877 = vpow.pop %v876
          %v878 = vmul.f32 %v833, 1.442695
          %v879 = vpow.pop %v878
          %v880 = vmul.f32 %v834, 1.442695
          %v881 = vpow.pop %v880
          %v882 = vmul.f32 %v835, 1.442695
          %v883 = vpow.pop %v882
          %v884 = vmul.f32 %v836, 1.442695
          %v885 = vpow.pop %v884
          %v886 = vmul.f32 %v837, 1.442695
          %v887 = vpow.pop %v886
          %v888 = vmul.f32 %v838, 1.442695
          %v889 = vpow.pop %v888
          %v890 = vmul.f32 %v839, 1.442695
          %v891 = vpow.pop %v890
          %v892 = vmul.f32 %v840, 1.442695
          %v893 = vpow.pop %v892
          %v894 = vmul.f32 %v841, 1.442695
          %v895 = vpow.pop %v894
          %v896 = vmul.f32 %v842, 1.442695
          %v897 = vpow.pop %v896
          %v898 = vmul.f32 %v843, 1.442695
          %v899 = vpow.pop %v898
          %v900 = vmul.f32 %v844, 1.442695
          %v901 = vpow.pop %v900
          %v902 = vmul.f32 %v845, 1.442695
          %v903 = vpow.pop %v902
          %v904 = vmul.f32 %v846, 1.442695
          %v905 = vpow.pop %v904
          %v906 = vmul.f32 %v847, 1.442695
          %v907 = vpow.pop %v906
          %v908 = vmul.f32 %v848, 1.442695
          %v909 = vpow.pop %v908
          %v910 = vmul.f32 %v849, 1.442695
          %v911 = vpow.pop %v910
          %v912 = vmul.f32 %v850, 1.442695
          %v913 = vpow.pop %v912
          %v914 = vmul.f32 %v851, 1.442695
          %v915 = vpow.pop %v914
          %v916 = vadd.f32 %v853, 1.0
          %v917 = vadd.f32 %v855, 1.0
          %v918 = vadd.f32 %v857, 1.0
          %v919 = vadd.f32 %v859, 1.0
          %v920 = vadd.f32 %v861, 1.0
          %v921 = vadd.f32 %v863, 1.0
          %v922 = vadd.f32 %v865, 1.0
          %v923 = vadd.f32 %v867, 1.0
          %v924 = vadd.f32 %v869, 1.0
          %v925 = vadd.f32 %v871, 1.0
          %v926 = vadd.f32 %v873, 1.0
          %v927 = vadd.f32 %v875, 1.0
          %v928 = vadd.f32 %v877, 1.0
          %v929 = vadd.f32 %v879, 1.0
          %v930 = vadd.f32 %v881, 1.0
          %v931 = vadd.f32 %v883, 1.0
          %v932 = vadd.f32 %v885, 1.0
          %v933 = vadd.f32 %v887, 1.0
          %v934 = vadd.f32 %v889, 1.0
          %v935 = vadd.f32 %v891, 1.0
          %v936 = vadd.f32 %v893, 1.0
          %v937 = vadd.f32 %v895, 1.0
          %v938 = vadd.f32 %v897, 1.0
          %v939 = vadd.f32 %v899, 1.0
          %v940 = vadd.f32 %v901, 1.0
          %v941 = vadd.f32 %v903, 1.0
          %v942 = vadd.f32 %v905, 1.0
          %v943 = vadd.f32 %v907, 1.0
          %v944 = vadd.f32 %v909, 1.0
          %v945 = vadd.f32 %v911, 1.0
          %v946 = vadd.f32 %v913, 1.0
          %v947 = vadd.f32 %v915, 1.0
          %v948 = vrcp.pop %v916
          %v949 = vmul.f32 1.0, %v948
          %v950 = vrcp.pop %v917
          %v951 = vmul.f32 1.0, %v950
          %v952 = vrcp.pop %v918
          %v953 = vmul.f32 1.0, %v952
          %v954 = vrcp.pop %v919
          %v955 = vmul.f32 1.0, %v954
          %v956 = vrcp.pop %v920
          %v957 = vmul.f32 1.0, %v956
          %v958 = vrcp.pop %v921
          %v959 = vmul.f32 1.0, %v958
          %v960 = vrcp.pop %v922
          %v961 = vmul.f32 1.0, %v960
          %v962 = vrcp.pop %v923
          %v963 = vmul.f32 1.0, %v962
          %v964 = vrcp.pop %v924
          %v965 = vmul.f32 1.0, %v964
          %v966 = vrcp.pop %v925
          %v967 = vmul.f32 1.0, %v966
          %v968 = vrcp.pop %v926
          %v969 = vmul.f32 1.0, %v968
          %v970 = vrcp.pop %v927
          %v971 = vmul.f32 1.0, %v970
          %v972 = vrcp.pop %v928
          %v973 = vmul.f32 1.0, %v972
          %v974 = vrcp.pop %v929
          %v975 = vmul.f32 1.0, %v974
          %v976 = vrcp.pop %v930
          %v977 = vmul.f32 1.0, %v976
          %v978 = vrcp.pop %v931
          %v979 = vmul.f32 1.0, %v978
          %v980 = vrcp.pop %v932
          %v981 = vmul.f32 1.0, %v980
          %v982 = vrcp.pop %v933
          %v983 = vmul.f32 1.0, %v982
          %v984 = vrcp.pop %v934
          %v985 = vmul.f32 1.0, %v984
          %v986 = vrcp.pop %v935
          %v987 = vmul.f32 1.0, %v986
          %v988 = vrcp.pop %v936
          %v989 = vmul.f32 1.0, %v988
          %v990 = vrcp.pop %v937
          %v991 = vmul.f32 1.0, %v990
          %v992 = vrcp.pop %v938
          %v993 = vmul.f32 1.0, %v992
          %v994 = vrcp.pop %v939
          %v995 = vmul.f32 1.0, %v994
          %v996 = vrcp.pop %v940
          %v997 = vmul.f32 1.0, %v996
          %v998 = vrcp.pop %v941
          %v999 = vmul.f32 1.0, %v998
          %v1000 = vrcp.pop %v942
          %v1001 = vmul.f32 1.0, %v1000
          %v1002 = vrcp.pop %v943
          %v1003 = vmul.f32 1.0, %v1002
          %v1004 = vrcp.pop %v944
          %v1005 = vmul.f32 1.0, %v1004
          %v1006 = vrcp.pop %v945
          %v1007 = vmul.f32 1.0, %v1006
          %v1008 = vrcp.pop %v946
          %v1009 = vmul.f32 1.0, %v1008
          %v1010 = vrcp.pop %v947
          %v1011 = vmul.f32 1.0, %v1010
          %v1012 = vmul.f32 %v788, %v949
          %v1013 = vmul.f32 %v789, %v951
          %v1014 = vmul.f32 %v790, %v953
          %v1015 = vmul.f32 %v791, %v955
          %v1016 = vmul.f32 %v792, %v957
          %v1017 = vmul.f32 %v793, %v959
          %v1018 = vmul.f32 %v794, %v961
          %v1019 = vmul.f32 %v795, %v963
          %v1020 = vmul.f32 %v796, %v965
          %v1021 = vmul.f32 %v797, %v967
          %v1022 = vmul.f32 %v798, %v969
          %v1023 = vmul.f32 %v799, %v971
          %v1024 = vmul.f32 %v800, %v973
          %v1025 = vmul.f32 %v801, %v975
          %v1026 = vmul.f32 %v802, %v977
          %v1027 = vmul.f32 %v803, %v979
          %v1028 = vmul.f32 %v804, %v981
          %v1029 = vmul.f32 %v805, %v983
          %v1030 = vmul.f32 %v806, %v985
          %v1031 = vmul.f32 %v807, %v987
          %v1032 = vmul.f32 %v808, %v989
          %v1033 = vmul.f32 %v809, %v991
          %v1034 = vmul.f32 %v810, %v993
          %v1035 = vmul.f32 %v811, %v995
          %v1036 = vmul.f32 %v812, %v997
          %v1037 = vmul.f32 %v813, %v999
          %v1038 = vmul.f32 %v814, %v1001
          %v1039 = vmul.f32 %v815, %v1003
          %v1040 = vmul.f32 %v816, %v1005
          %v1041 = vmul.f32 %v817, %v1007
          %v1042 = vmul.f32 %v818, %v1009
          %v1043 = vmul.f32 %v819, %v1011
          %1044 = vst [vmem:[%s249] sm:$0xff] %v1012
          %1045 = vst [vmem:[%s249 + $0x8] sm:$0xff] %v1013
          %1046 = vst [vmem:[%s249 + $0x10] sm:$0xff] %v1014
          %1047 = vst [vmem:[%s249 + $0x18] sm:$0xff] %v1015
          %1048 = vst [vmem:[%s249 + $0x20] sm:$0xff] %v1016
          %1049 = vst [vmem:[%s249 + $0x28] sm:$0xff] %v1017
          %1050 = vst [vmem:[%s249 + $0x30] sm:$0xff] %v1018
          %1051 = vst [vmem:[%s249 + $0x38] sm:$0xff] %v1019
          %1052 = vst [vmem:[%s249 + $0x40] sm:$0xff] %v1020
          %1053 = vst [vmem:[%s249 + $0x48] sm:$0xff] %v1021
          %1054 = vst [vmem:[%s249 + $0x50] sm:$0xff] %v1022
          %1055 = vst [vmem:[%s249 + $0x58] sm:$0xff] %v1023
          %1056 = vst [vmem:[%s249 + $0x60] sm:$0xff] %v1024
          %1057 = vst [vmem:[%s249 + $0x68] sm:$0xff] %v1025
          %1058 = vst [vmem:[%s249 + $0x70] sm:$0xff] %v1026
          %1059 = vst [vmem:[%s249 + $0x78] sm:$0xff] %v1027
          %1060 = vst [vmem:[%s249 + $0x80] sm:$0xff] %v1028
          %1061 = vst [vmem:[%s249 + $0x88] sm:$0xff] %v1029
          %1062 = vst [vmem:[%s249 + $0x90] sm:$0xff] %v1030
          %1063 = vst [vmem:[%s249 + $0x98] sm:$0xff] %v1031
          %1064 = vst [vmem:[%s249 + $0xa0] sm:$0xff] %v1032
          %1065 = vst [vmem:[%s249 + $0xa8] sm:$0xff] %v1033
          %1066 = vst [vmem:[%s249 + $0xb0] sm:$0xff] %v1034
          %1067 = vst [vmem:[%s249 + $0xb8] sm:$0xff] %v1035
          %1068 = vst [vmem:[%s249 + $0xc0] sm:$0xff] %v1036
          %1069 = vst [vmem:[%s249 + $0xc8] sm:$0xff] %v1037
          %1070 = vst [vmem:[%s249 + $0xd0] sm:$0xff] %v1038
          %1071 = vst [vmem:[%s249 + $0xd8] sm:$0xff] %v1039
          %1072 = vst [vmem:[%s249 + $0xe0] sm:$0xff] %v1040
          %1073 = vst [vmem:[%s249 + $0xe8] sm:$0xff] %v1041
          %1074 = vst [vmem:[%s249 + $0xf0] sm:$0xff] %v1042
          %1075 = vst [vmem:[%s249 + $0xf8] sm:$0xff] %v1043
        $region52: #{tpu_custom_call.1} parent=31 // pred_fallthru
          _
        %s1076 = sand.u32 %s132, 1
        %s1077 = scalar_lea.sflag [#allocation5], %s1076
        %s1078 = sand.u32 %s132, 1
        %s1079 = smul.addr %s1078, 256
        %s1080 = scalar_lea.vmem [#allocation8], %s1079
        // Predicated region
        $region53: #{tpu_custom_call.1} parent=31 // pred_check
          %p1081 = pneg %p142
        $region54: #{tpu_custom_call.1} parent=31 // pred_check_branch
          %1083 = sbr.rel (%p1081) target = $region56
        $region55: #{tpu_custom_call.1} parent=31 // pred_region
          %s1084 = smul.u32 32, %s26
          %s1086 = ssub.s32 4096, 4096
          %1087 = vsyncadd %s1077, %s1086
          %s1088 = sadd.s32 %s27, %s1084
          %s1089 = smul.addr %s1088, 128
          %s1090 = scalar_lea.hbm %s3, %s1089
          %s1091 = sshll.u32 %s1080, 4
          %s1092 = int_to_ptr.vmem [resolvable:$true] %s1091
          %1097 = dma.vmem_to_hbm [thread:$0]  %s1092, 4096, %s1090, %s1077, 128, 128, 8
        $region56: #{tpu_custom_call.1} parent=31 // pred_fallthru
          _
      $region32: #{tpu_custom_call.1} parent=5 // pred_fallthru
        _
      %p1098 = scmp.le.s32.totalorder 2, %s16
      // Predicated region
      $region57: #{tpu_custom_call.1} parent=5 // pred_check
        %p1099 = pneg %p1098
      $region58: #{tpu_custom_call.1} parent=5 // pred_check_branch
        %1101 = sbr.rel (%p1099) target = $region60
      $region59: #{tpu_custom_call.1} parent=5 // pred_region
        %s1102 = ssub.s32 %s16, 2
        // Predicated region
        $region61: #{tpu_custom_call.1} parent=59 // pred_check
          %p1103 = pneg %p148
        $region62: #{tpu_custom_call.1} parent=59 // pred_check_branch
          %1105 = sbr.rel (%p1103) target = $region64
        $region63: #{tpu_custom_call.1} parent=59 // pred_region
          %s1106 = sand.u32 %s133, 1
          %s1107 = scalar_lea.sflag [#allocation5], %s1106
          %s1108 = sand.u32 %s133, 1
          %s1109 = smul.addr %s1108, 256
          %s1110 = scalar_lea.vmem [#allocation8], %s1109
          %1111 = dma.done %s1107, 4096
        $region64: #{tpu_custom_call.1} parent=59 // pred_fallthru
          _
      $region60: #{tpu_custom_call.1} parent=5 // pred_fallthru
        _
    $region6: #{tpu_custom_call.1} parent=1 // loop_footer
      %s20 = sadd.s32 1, %s16
    $region7: #{tpu_custom_call.1} parent=1 // loop_footer_branch
      %15 = sbr.rel target = $region3
    $region8: #{tpu_custom_call.1} parent=1 // loop_exit
      _
    %1112 = vsyncpa [#allocation4], 1
    %s1113 = scalar_lea.sflag [#allocation4], 1
    %1114 = vsyncpa %s1113, 1
    %1115 = vsyncpa [#allocation7], 1
    %1116 = vsyncpa [#allocation5], 1
    %s1117 = scalar_lea.sflag [#allocation5], 1
    %1118 = vsyncpa %s1117, 1

</llo_original>
